<compile_context>
chip_gen: v7x
topology: tpu7x:2x2x1
jax: 0.10.0
libtpu: 0.0.40
codegen_flags: <defaults>
</compile_context>

<pallas_src>
import jax
import jax.numpy as jnp
from jax import lax
from jax.experimental import pallas as pl
from jax.experimental.pallas import tpu as pltpu

ENC_DIM = 40
HID_DIM = 40
OUT_DIM = 5
N_BN_LAYERS = 4
BN_EPS = 1e-5

# f32 preserves the module's numerics exactly; bf16 is the v6e/v7x fast path
# (cuts MXU passes ~3x) at the cost of relaxed matmul precision.
MXU_INPUT_DTYPE = jnp.float32


def r2z_kernel(r_ref, w_ref, gamma_ref, beta_ref, wh_ref, bh_ref, out_ref):
    # r_ref:     (B, 40)      input encodings
    # w_ref:     (4, 40, 40)  stacked hidden weights, already (in, out)
    # gamma_ref: (4, 40), beta_ref: (4, 40)  BatchNorm1d affine params
    # wh_ref:    (40, 10)     fused head weights [mean | log_cov], (in, out)
    # bh_ref:    (1, 10)      fused head bias
    # out_ref:   (B, 10)      fused head output
    B = r_ref.shape[0]
    inv_b = 1.0 / B  # static (trace-time) constant

    h = r_ref[...].astype(jnp.float32)
    for i in range(N_BN_LAYERS):
        w = w_ref[i]                                            # (40, 40)
        h = jnp.dot(h.astype(MXU_INPUT_DTYPE), w.astype(MXU_INPUT_DTYPE),
                    preferred_element_type=jnp.float32)
        # One-pass BatchNorm1d (training mode, biased variance):
        # the two reductions are independent, and normalize + affine folds
        # into a single scale/shift before the ReLU.
        s1 = jnp.sum(h, axis=0, keepdims=True)                  # (1, 40)
        s2 = jnp.sum(h * h, axis=0, keepdims=True)              # (1, 40)
        mu = s1 * inv_b
        var = jnp.maximum(s2 * inv_b - mu * mu, 0.0)            # cancellation guard
        scale = gamma_ref[i:i + 1, :] * lax.rsqrt(var + BN_EPS)  # EUP rsqrt
        shift = beta_ref[i:i + 1, :] - mu * scale
        h = jnp.maximum(h * scale + shift, 0.0)                 # fused BN + ReLU

    # Fused mean / log-cov heads: one (B,40) @ (40,10) matmul + bias, one store.
    out_ref[...] = (jnp.dot(h.astype(MXU_INPUT_DTYPE),
                            wh_ref[...].astype(MXU_INPUT_DTYPE),
                            preferred_element_type=jnp.float32)
                    + bh_ref[...])


def r2z_forward(r, w_stack, gamma, beta, w_mean, b_mean, w_cov, b_cov):
    B = r.shape[0]
    # Fuse the two heads host-side -> one matmul + one output DMA in-kernel.
    w_heads = jnp.concatenate([w_mean, w_cov], axis=1)          # (40, 10)
    b_heads = jnp.concatenate([b_mean, b_cov], axis=1)          # (1, 10)

    vmem = pl.BlockSpec(memory_space=pltpu.MemorySpace.VMEM)

    flops = (2 * B * ENC_DIM * HID_DIM * N_BN_LAYERS            # hidden matmuls
             + 2 * B * HID_DIM * 2 * OUT_DIM                    # fused head matmul
             + 10 * B * HID_DIM * N_BN_LAYERS)                  # BN/ReLU elementwise
    bytes_accessed = 4 * (r.size + w_stack.size + gamma.size + beta.size
                          + w_heads.size + b_heads.size + B * 2 * OUT_DIM)

    out = pl.pallas_call(
        r2z_kernel,
        out_shape=jax.ShapeDtypeStruct((B, 2 * OUT_DIM), jnp.float32),
        in_specs=[vmem] * 6,
        out_specs=vmem,
        cost_estimate=pl.CostEstimate(
            flops=flops,
            transcendentals=N_BN_LAYERS * HID_DIM,
            bytes_accessed=bytes_accessed),
    )(r, w_stack, gamma, beta, w_heads, b_heads)

    return out[:, :OUT_DIM], out[:, OUT_DIM:]


def reference_forward(r, w_stack, gamma, beta, w_mean, b_mean, w_cov, b_cov):
    """Pure-JAX reference (two-pass BN, separate heads) for a sanity check."""
    h = r.astype(jnp.float32)
    for i in range(N_BN_LAYERS):
        h = h @ w_stack[i]
        mu = jnp.mean(h, axis=0, keepdims=True)
        var = jnp.mean((h - mu) ** 2, axis=0, keepdims=True)
        h = (h - mu) / jnp.sqrt(var + BN_EPS) * gamma[i] + beta[i]
        h = jnp.maximum(h, 0.0)
    return h @ w_mean + b_mean, h @ w_cov + b_cov


if __name__ == "__main__":
    key = jax.random.PRNGKey(0)
    keys = jax.random.split(key, 8)

    B = 8  # batch size (BatchNorm1d training mode needs B > 1)

    # Deterministic synthetic parameters (shapes follow the torch module).
    r = jax.random.normal(keys[0], (B, ENC_DIM), dtype=jnp.float32)

    # Hidden Linear weights, torch shape (out, in); store transposed (in, out).
    w_stack = (jax.random.normal(keys[1], (N_BN_LAYERS, ENC_DIM, HID_DIM),
                                 dtype=jnp.float32) * 0.1)
    # BatchNorm1d affine params (torch default: weight=1, bias=0) — perturb a
    # bit so the affine path is actually exercised.
    gamma = jnp.ones((N_BN_LAYERS, HID_DIM), jnp.float32) \
        + 0.05 * jax.random.normal(keys[2], (N_BN_LAYERS, HID_DIM))
    beta = 0.05 * jax.random.normal(keys[3], (N_BN_LAYERS, HID_DIM))

    # Output heads: Linear(40, 5) with bias.
    w_mean = jax.random.normal(keys[4], (HID_DIM, OUT_DIM), jnp.float32) * 0.1
    b_mean = jax.random.normal(keys[5], (1, OUT_DIM), jnp.float32) * 0.1
    w_cov = jax.random.normal(keys[6], (HID_DIM, OUT_DIM), jnp.float32) * 0.1
    b_cov = jax.random.normal(keys[7], (1, OUT_DIM), jnp.float32) * 0.1

    mean_out, cov_out = r2z_forward(r, w_stack, gamma, beta,
                                    w_mean, b_mean, w_cov, b_cov)
    jax.block_until_ready((mean_out, cov_out))

    ref_mean, ref_cov = reference_forward(r, w_stack, gamma, beta,
                                          w_mean, b_mean, w_cov, b_cov)
    assert mean_out.shape == (B, OUT_DIM) and cov_out.shape == (B, OUT_DIM)
    assert jnp.allclose(mean_out, ref_mean, atol=1e-4, rtol=1e-4)
    assert jnp.allclose(cov_out, ref_cov, atol=1e-4, rtol=1e-4)

    print("KERNEL_OK")
</pallas_src>

<mosaic_0001>
module attributes {stable_mosaic.version = 11 : i64} {
  func.func @r2z_kernel(%arg0: memref<8x40xf32, #tpu.memory_space<vmem>>, %arg1: memref<4x40x40xf32, #tpu.memory_space<vmem>>, %arg2: memref<4x40xf32, #tpu.memory_space<vmem>>, %arg3: memref<4x40xf32, #tpu.memory_space<vmem>>, %arg4: memref<40x10xf32, #tpu.memory_space<vmem>>, %arg5: memref<1x10xf32, #tpu.memory_space<vmem>>, %arg6: memref<8x10xf32, #tpu.memory_space<vmem>>) attributes {dimension_semantics = [], scalar_prefetch = 0 : i64, scratch_operands = 0 : i64, tpu.core_type = #tpu.core_type<tc>} {
    %c0 = arith.constant 0 : index
    %c0_0 = arith.constant 0 : index
    %0 = vector.load %arg0[%c0, %c0_0] : memref<8x40xf32, #tpu.memory_space<vmem>>, vector<8x40xf32>
    %c0_1 = arith.constant 0 : index
    %c0_2 = arith.constant 0 : index
    %c0_3 = arith.constant 0 : index
    %1 = vector.load %arg1[%c0_1, %c0_2, %c0_3] : memref<4x40x40xf32, #tpu.memory_space<vmem>>, vector<1x40x40xf32>
    %2 = vector.shape_cast %1 : vector<1x40x40xf32> to vector<40x40xf32>
    %cst = arith.constant dense<0.000000e+00> : vector<8x40xf32>
    %3 = tpu.matmul %0, %2, %cst {dimension_numbers = #tpu.dot_dimension_numbers<[1], [0], [0], [1], [0, 0, 1, 1], [], []>} : vector<8x40xf32>, vector<40x40xf32>, vector<8x40xf32> -> vector<8x40xf32>
    %cst_4 = arith.constant dense<0.000000e+00> : vector<40xf32>
    %4 = vector.multi_reduction <add>, %3, %cst_4 [0] : vector<8x40xf32> to vector<40xf32>
    %5 = vector.shape_cast %4 : vector<40xf32> to vector<1x40xf32>
    %6 = arith.mulf %3, %3 : vector<8x40xf32>
    %cst_5 = arith.constant dense<0.000000e+00> : vector<40xf32>
    %7 = vector.multi_reduction <add>, %6, %cst_5 [0] : vector<8x40xf32> to vector<40xf32>
    %8 = vector.shape_cast %7 : vector<40xf32> to vector<1x40xf32>
    %cst_6 = arith.constant 1.250000e-01 : f32
    %9 = vector.broadcast %cst_6 : f32 to vector<1x40xf32>
    %10 = arith.mulf %5, %9 : vector<1x40xf32>
    %cst_7 = arith.constant 1.250000e-01 : f32
    %11 = vector.broadcast %cst_7 : f32 to vector<1x40xf32>
    %12 = arith.mulf %8, %11 : vector<1x40xf32>
    %13 = arith.mulf %10, %10 : vector<1x40xf32>
    %14 = arith.subf %12, %13 : vector<1x40xf32>
    %cst_8 = arith.constant 0.000000e+00 : f32
    %15 = vector.broadcast %cst_8 : f32 to vector<1x40xf32>
    %16 = arith.maximumf %14, %15 : vector<1x40xf32>
    %c0_9 = arith.constant 0 : index
    %c0_10 = arith.constant 0 : index
    %17 = vector.load %arg2[%c0_9, %c0_10] : memref<4x40xf32, #tpu.memory_space<vmem>>, vector<1x40xf32>
    %cst_11 = arith.constant 9.99999974E-6 : f32
    %18 = vector.broadcast %cst_11 : f32 to vector<1x40xf32>
    %19 = arith.addf %16, %18 : vector<1x40xf32>
    %20 = math.rsqrt %19 : vector<1x40xf32>
    %21 = arith.mulf %17, %20 : vector<1x40xf32>
    %c0_12 = arith.constant 0 : index
    %c0_13 = arith.constant 0 : index
    %22 = vector.load %arg3[%c0_12, %c0_13] : memref<4x40xf32, #tpu.memory_space<vmem>>, vector<1x40xf32>
    %23 = arith.mulf %10, %21 : vector<1x40xf32>
    %24 = arith.subf %22, %23 : vector<1x40xf32>
    %25 = vector.broadcast %21 : vector<1x40xf32> to vector<8x40xf32>
    %26 = arith.mulf %3, %25 : vector<8x40xf32>
    %27 = vector.broadcast %24 : vector<1x40xf32> to vector<8x40xf32>
    %28 = arith.addf %26, %27 : vector<8x40xf32>
    %cst_14 = arith.constant 0.000000e+00 : f32
    %29 = vector.broadcast %cst_14 : f32 to vector<8x40xf32>
    %30 = arith.maximumf %28, %29 : vector<8x40xf32>
    %c1 = arith.constant 1 : index
    %c0_15 = arith.constant 0 : index
    %c0_16 = arith.constant 0 : index
    %31 = vector.load %arg1[%c1, %c0_15, %c0_16] : memref<4x40x40xf32, #tpu.memory_space<vmem>>, vector<1x40x40xf32>
    %32 = vector.shape_cast %31 : vector<1x40x40xf32> to vector<40x40xf32>
    %cst_17 = arith.constant dense<0.000000e+00> : vector<8x40xf32>
    %33 = tpu.matmul %30, %32, %cst_17 {dimension_numbers = #tpu.dot_dimension_numbers<[1], [0], [0], [1], [0, 0, 1, 1], [], []>} : vector<8x40xf32>, vector<40x40xf32>, vector<8x40xf32> -> vector<8x40xf32>
    %cst_18 = arith.constant dense<0.000000e+00> : vector<40xf32>
    %34 = vector.multi_reduction <add>, %33, %cst_18 [0] : vector<8x40xf32> to vector<40xf32>
    %35 = vector.shape_cast %34 : vector<40xf32> to vector<1x40xf32>
    %36 = arith.mulf %33, %33 : vector<8x40xf32>
    %cst_19 = arith.constant dense<0.000000e+00> : vector<40xf32>
    %37 = vector.multi_reduction <add>, %36, %cst_19 [0] : vector<8x40xf32> to vector<40xf32>
    %38 = vector.shape_cast %37 : vector<40xf32> to vector<1x40xf32>
    %cst_20 = arith.constant 1.250000e-01 : f32
    %39 = vector.broadcast %cst_20 : f32 to vector<1x40xf32>
    %40 = arith.mulf %35, %39 : vector<1x40xf32>
    %cst_21 = arith.constant 1.250000e-01 : f32
    %41 = vector.broadcast %cst_21 : f32 to vector<1x40xf32>
    %42 = arith.mulf %38, %41 : vector<1x40xf32>
    %43 = arith.mulf %40, %40 : vector<1x40xf32>
    %44 = arith.subf %42, %43 : vector<1x40xf32>
    %cst_22 = arith.constant 0.000000e+00 : f32
    %45 = vector.broadcast %cst_22 : f32 to vector<1x40xf32>
    %46 = arith.maximumf %44, %45 : vector<1x40xf32>
    %c1_23 = arith.constant 1 : index
    %c0_24 = arith.constant 0 : index
    %47 = vector.load %arg2[%c1_23, %c0_24] : memref<4x40xf32, #tpu.memory_space<vmem>>, vector<1x40xf32>
    %cst_25 = arith.constant 9.99999974E-6 : f32
    %48 = vector.broadcast %cst_25 : f32 to vector<1x40xf32>
    %49 = arith.addf %46, %48 : vector<1x40xf32>
    %50 = math.rsqrt %49 : vector<1x40xf32>
    %51 = arith.mulf %47, %50 : vector<1x40xf32>
    %c1_26 = arith.constant 1 : index
    %c0_27 = arith.constant 0 : index
    %52 = vector.load %arg3[%c1_26, %c0_27] : memref<4x40xf32, #tpu.memory_space<vmem>>, vector<1x40xf32>
    %53 = arith.mulf %40, %51 : vector<1x40xf32>
    %54 = arith.subf %52, %53 : vector<1x40xf32>
    %55 = vector.broadcast %51 : vector<1x40xf32> to vector<8x40xf32>
    %56 = arith.mulf %33, %55 : vector<8x40xf32>
    %57 = vector.broadcast %54 : vector<1x40xf32> to vector<8x40xf32>
    %58 = arith.addf %56, %57 : vector<8x40xf32>
    %cst_28 = arith.constant 0.000000e+00 : f32
    %59 = vector.broadcast %cst_28 : f32 to vector<8x40xf32>
    %60 = arith.maximumf %58, %59 : vector<8x40xf32>
    %c2 = arith.constant 2 : index
    %c0_29 = arith.constant 0 : index
    %c0_30 = arith.constant 0 : index
    %61 = vector.load %arg1[%c2, %c0_29, %c0_30] : memref<4x40x40xf32, #tpu.memory_space<vmem>>, vector<1x40x40xf32>
    %62 = vector.shape_cast %61 : vector<1x40x40xf32> to vector<40x40xf32>
    %cst_31 = arith.constant dense<0.000000e+00> : vector<8x40xf32>
    %63 = tpu.matmul %60, %62, %cst_31 {dimension_numbers = #tpu.dot_dimension_numbers<[1], [0], [0], [1], [0, 0, 1, 1], [], []>} : vector<8x40xf32>, vector<40x40xf32>, vector<8x40xf32> -> vector<8x40xf32>
    %cst_32 = arith.constant dense<0.000000e+00> : vector<40xf32>
    %64 = vector.multi_reduction <add>, %63, %cst_32 [0] : vector<8x40xf32> to vector<40xf32>
    %65 = vector.shape_cast %64 : vector<40xf32> to vector<1x40xf32>
    %66 = arith.mulf %63, %63 : vector<8x40xf32>
    %cst_33 = arith.constant dense<0.000000e+00> : vector<40xf32>
    %67 = vector.multi_reduction <add>, %66, %cst_33 [0] : vector<8x40xf32> to vector<40xf32>
    %68 = vector.shape_cast %67 : vector<40xf32> to vector<1x40xf32>
    %cst_34 = arith.constant 1.250000e-01 : f32
    %69 = vector.broadcast %cst_34 : f32 to vector<1x40xf32>
    %70 = arith.mulf %65, %69 : vector<1x40xf32>
    %cst_35 = arith.constant 1.250000e-01 : f32
    %71 = vector.broadcast %cst_35 : f32 to vector<1x40xf32>
    %72 = arith.mulf %68, %71 : vector<1x40xf32>
    %73 = arith.mulf %70, %70 : vector<1x40xf32>
    %74 = arith.subf %72, %73 : vector<1x40xf32>
    %cst_36 = arith.constant 0.000000e+00 : f32
    %75 = vector.broadcast %cst_36 : f32 to vector<1x40xf32>
    %76 = arith.maximumf %74, %75 : vector<1x40xf32>
    %c2_37 = arith.constant 2 : index
    %c0_38 = arith.constant 0 : index
    %77 = vector.load %arg2[%c2_37, %c0_38] : memref<4x40xf32, #tpu.memory_space<vmem>>, vector<1x40xf32>
    %cst_39 = arith.constant 9.99999974E-6 : f32
    %78 = vector.broadcast %cst_39 : f32 to vector<1x40xf32>
    %79 = arith.addf %76, %78 : vector<1x40xf32>
    %80 = math.rsqrt %79 : vector<1x40xf32>
    %81 = arith.mulf %77, %80 : vector<1x40xf32>
    %c2_40 = arith.constant 2 : index
    %c0_41 = arith.constant 0 : index
    %82 = vector.load %arg3[%c2_40, %c0_41] : memref<4x40xf32, #tpu.memory_space<vmem>>, vector<1x40xf32>
    %83 = arith.mulf %70, %81 : vector<1x40xf32>
    %84 = arith.subf %82, %83 : vector<1x40xf32>
    %85 = vector.broadcast %81 : vector<1x40xf32> to vector<8x40xf32>
    %86 = arith.mulf %63, %85 : vector<8x40xf32>
    %87 = vector.broadcast %84 : vector<1x40xf32> to vector<8x40xf32>
    %88 = arith.addf %86, %87 : vector<8x40xf32>
    %cst_42 = arith.constant 0.000000e+00 : f32
    %89 = vector.broadcast %cst_42 : f32 to vector<8x40xf32>
    %90 = arith.maximumf %88, %89 : vector<8x40xf32>
    %c3 = arith.constant 3 : index
    %c0_43 = arith.constant 0 : index
    %c0_44 = arith.constant 0 : index
    %91 = vector.load %arg1[%c3, %c0_43, %c0_44] : memref<4x40x40xf32, #tpu.memory_space<vmem>>, vector<1x40x40xf32>
    %92 = vector.shape_cast %91 : vector<1x40x40xf32> to vector<40x40xf32>
    %cst_45 = arith.constant dense<0.000000e+00> : vector<8x40xf32>
    %93 = tpu.matmul %90, %92, %cst_45 {dimension_numbers = #tpu.dot_dimension_numbers<[1], [0], [0], [1], [0, 0, 1, 1], [], []>} : vector<8x40xf32>, vector<40x40xf32>, vector<8x40xf32> -> vector<8x40xf32>
    %cst_46 = arith.constant dense<0.000000e+00> : vector<40xf32>
    %94 = vector.multi_reduction <add>, %93, %cst_46 [0] : vector<8x40xf32> to vector<40xf32>
    %95 = vector.shape_cast %94 : vector<40xf32> to vector<1x40xf32>
    %96 = arith.mulf %93, %93 : vector<8x40xf32>
    %cst_47 = arith.constant dense<0.000000e+00> : vector<40xf32>
    %97 = vector.multi_reduction <add>, %96, %cst_47 [0] : vector<8x40xf32> to vector<40xf32>
    %98 = vector.shape_cast %97 : vector<40xf32> to vector<1x40xf32>
    %cst_48 = arith.constant 1.250000e-01 : f32
    %99 = vector.broadcast %cst_48 : f32 to vector<1x40xf32>
    %100 = arith.mulf %95, %99 : vector<1x40xf32>
    %cst_49 = arith.constant 1.250000e-01 : f32
    %101 = vector.broadcast %cst_49 : f32 to vector<1x40xf32>
    %102 = arith.mulf %98, %101 : vector<1x40xf32>
    %103 = arith.mulf %100, %100 : vector<1x40xf32>
    %104 = arith.subf %102, %103 : vector<1x40xf32>
    %cst_50 = arith.constant 0.000000e+00 : f32
    %105 = vector.broadcast %cst_50 : f32 to vector<1x40xf32>
    %106 = arith.maximumf %104, %105 : vector<1x40xf32>
    %c3_51 = arith.constant 3 : index
    %c0_52 = arith.constant 0 : index
    %107 = vector.load %arg2[%c3_51, %c0_52] : memref<4x40xf32, #tpu.memory_space<vmem>>, vector<1x40xf32>
    %cst_53 = arith.constant 9.99999974E-6 : f32
    %108 = vector.broadcast %cst_53 : f32 to vector<1x40xf32>
    %109 = arith.addf %106, %108 : vector<1x40xf32>
    %110 = math.rsqrt %109 : vector<1x40xf32>
    %111 = arith.mulf %107, %110 : vector<1x40xf32>
    %c3_54 = arith.constant 3 : index
    %c0_55 = arith.constant 0 : index
    %112 = vector.load %arg3[%c3_54, %c0_55] : memref<4x40xf32, #tpu.memory_space<vmem>>, vector<1x40xf32>
    %113 = arith.mulf %100, %111 : vector<1x40xf32>
    %114 = arith.subf %112, %113 : vector<1x40xf32>
    %115 = vector.broadcast %111 : vector<1x40xf32> to vector<8x40xf32>
    %116 = arith.mulf %93, %115 : vector<8x40xf32>
    %117 = vector.broadcast %114 : vector<1x40xf32> to vector<8x40xf32>
    %118 = arith.addf %116, %117 : vector<8x40xf32>
    %cst_56 = arith.constant 0.000000e+00 : f32
    %119 = vector.broadcast %cst_56 : f32 to vector<8x40xf32>
    %120 = arith.maximumf %118, %119 : vector<8x40xf32>
    %c0_57 = arith.constant 0 : index
    %c0_58 = arith.constant 0 : index
    %121 = vector.load %arg4[%c0_57, %c0_58] : memref<40x10xf32, #tpu.memory_space<vmem>>, vector<40x10xf32>
    %cst_59 = arith.constant dense<0.000000e+00> : vector<8x10xf32>
    %122 = tpu.matmul %120, %121, %cst_59 {dimension_numbers = #tpu.dot_dimension_numbers<[1], [0], [0], [1], [0, 0, 1, 1], [], []>} : vector<8x40xf32>, vector<40x10xf32>, vector<8x10xf32> -> vector<8x10xf32>
    %c0_60 = arith.constant 0 : index
    %c0_61 = arith.constant 0 : index
    %123 = vector.load %arg5[%c0_60, %c0_61] : memref<1x10xf32, #tpu.memory_space<vmem>>, vector<1x10xf32>
    %124 = vector.broadcast %123 : vector<1x10xf32> to vector<8x10xf32>
    %125 = arith.addf %122, %124 : vector<8x10xf32>
    %c0_62 = arith.constant 0 : index
    %c0_63 = arith.constant 0 : index
    %126 = vector.load %arg6[%c0_62, %c0_63] : memref<8x10xf32, #tpu.memory_space<vmem>>, vector<8x10xf32>
    tpu.vector_store %arg6[%c0_62, %c0_63], %125 {strides = array<i32>} : memref<8x10xf32, #tpu.memory_space<vmem>>, vector<8x10xf32>,
    return
  }
}

</mosaic_0001>

<llo_original>
// kernel: tpu_custom_call.1
$region0: #{tpu_custom_call.1}
  #allocation0 [shape = 'u32[]', space=smem, size = 0x4, offset = 0x4, fixed_abs, tag = 'smem constant byte address 0x4 - core index']
  #allocation1 [shape = 'u32[144,128]{1,0:T(1,128)}', space=vmem, size = 0x12000, scoped, tag = 'internal scratch']
  %s0 = inlined_call_operand.vmem [shape: f32[8,40], index: 0, kind: input, shape index: {}]
  %s1 = inlined_call_operand.hbm [shape: f32[4,40,40], index: 1, kind: input, shape index: {}]
  %s2 = inlined_call_operand.vmem [shape: f32[4,40], index: 2, kind: input, shape index: {}]
  %s3 = inlined_call_operand.vmem [shape: f32[4,40], index: 3, kind: input, shape index: {}]
  %s4 = inlined_call_operand.vmem [shape: f32[40,10], index: 4, kind: input, shape index: {}]
  %s5 = inlined_call_operand.vmem [shape: f32[1,10], index: 5, kind: input, shape index: {}]
  %s6 = inlined_call_operand.hbm [shape: f32[8,10], index: 6, kind: output, shape index: {}]
  %s7 = sld [smem:[#allocation0]]
  $region38: #{tpu_custom_call.1} parent=0
    _
  %s9 = ssub.s32 1, %s7
  %s10 = scalar_select 0, %s9, %s7
  $region1: #{tpu_custom_call.1} parent=0
    #allocation2 [shape = 'u8[81920]{0}', space=vmem, size = 0x14000, scoped, tag = 'input window, operand 1, single buffered']
    #allocation3 [shape = 's32[1]{0}', space=sflag, size = 0x4, scoped, tag = 'scoped memory for tpu_custom_call.1']
    #allocation4 [shape = 's32[1]{0}', space=sflag, size = 0x4, scoped, tag = 'scoped memory for tpu_custom_call.1']
    #allocation5 [shape = 'u8[4096]{0}', space=vmem, size = 0x1000, scoped, tag = 'output window, operand 0, single buffered']
    %11 = vsyncpa [#allocation3], 0
    %12 = vsyncpa [#allocation4], 0
    // Predicated region
    $region2: #{tpu_custom_call.1} parent=1 // pred_check
      _
    $region3: #{tpu_custom_call.1} parent=1 // pred_check_branch
      %14 = sbr.rel (0) target = $region5
    $region4: #{tpu_custom_call.1} parent=1 // pred_region
      _
    $region5: #{tpu_custom_call.1} parent=1 // pred_fallthru
      _
    // Predicated region
    $region6: #{tpu_custom_call.1} parent=1 // pred_check
      _
    $region7: #{tpu_custom_call.1} parent=1 // pred_check_branch
      %16 = sbr.rel (0) target = $region9
    $region8: #{tpu_custom_call.1} parent=1 // pred_region
      %s18 = ssub.s32 2560, 2560
      %19 = vsyncadd [#allocation3], %s18
      %s20 = sshll.u32 [#allocation2], 4
      %s21 = int_to_ptr.vmem [resolvable:$true] %s20
      %26 = dma.hbm_to_vmem [thread:$0]  %s1, 2560, %s21, [#allocation3], 128, 128, 8
    $region9: #{tpu_custom_call.1} parent=1 // pred_fallthru
      _
    // Predicated region
    $region10: #{tpu_custom_call.1} parent=1 // pred_check
      _
    $region11: #{tpu_custom_call.1} parent=1 // pred_check_branch
      %28 = sbr.rel (0) target = $region13
    $region12: #{tpu_custom_call.1} parent=1 // pred_region
      _
    $region13: #{tpu_custom_call.1} parent=1 // pred_fallthru
      _
    // Predicated region
    $region14: #{tpu_custom_call.1} parent=1 // pred_check
      _
    $region15: #{tpu_custom_call.1} parent=1 // pred_check_branch
      %30 = sbr.rel (0) target = $region17
    $region16: #{tpu_custom_call.1} parent=1 // pred_region
      _
    $region17: #{tpu_custom_call.1} parent=1 // pred_fallthru
      _
    // Predicated region
    $region18: #{tpu_custom_call.1} parent=1 // pred_check
      _
    $region19: #{tpu_custom_call.1} parent=1 // pred_check_branch
      %32 = sbr.rel (0) target = $region21
    $region20: #{tpu_custom_call.1} parent=1 // pred_region
      _
    $region21: #{tpu_custom_call.1} parent=1 // pred_fallthru
      _
    // Predicated region
    $region22: #{tpu_custom_call.1} parent=1 // pred_check
      _
    $region23: #{tpu_custom_call.1} parent=1 // pred_check_branch
      %34 = sbr.rel (0) target = $region25
    $region24: #{tpu_custom_call.1} parent=1 // pred_region
      _
    $region25: #{tpu_custom_call.1} parent=1 // pred_fallthru
      _
    // Predicated region
    $region26: #{tpu_custom_call.1} parent=1 // pred_check
      _
    $region27: #{tpu_custom_call.1} parent=1 // pred_check_branch
      %36 = sbr.rel (0) target = $region29
    $region28: #{tpu_custom_call.1} parent=1 // pred_region
      %37 = dma.done [#allocation3], 2560
    $region29: #{tpu_custom_call.1} parent=1 // pred_fallthru
      _
    %v38 = vld [vmem:[%s0] sm:$0xff]
    %v39 = vld [vmem:[#allocation2] sm:$0xff]
    %v40 = vld [vmem:[#allocation2 + $0x8] sm:$0xff]
    %v41 = vld [vmem:[#allocation2 + $0x10] sm:$0xff]
    %v42 = vld [vmem:[#allocation2 + $0x18] sm:$0xff]
    %v43 = vld [vmem:[#allocation2 + $0x20] sm:$0xff]
    %vm44 = vcmask 326656
    %v46 = vsel %vm44, %v38, 0
    %48 = vmatprep.subr.mxu0 0.0
    %49 = vmatpush1.msra.mxu0 %v39
    %50 = vmatprep.subr.mxu0 0.0
    %51 = vmatpush1.msra.mxu0 %v40
    %52 = vmatprep.subr.mxu0 0.0
    %53 = vmatpush1.msra.mxu0 %v41
    %54 = vmatprep.subr.mxu0 0.0
    %55 = vmatpush1.msra.mxu0 %v42
    %56 = vmatprep.subr.mxu0 0.0
    %57 = vmatpush1.msra.mxu0 %v43
    %58 = vmatprep.subr.mxu0 0.0
    %59 = vmatpush1.msra.mxu0 0.0
    %60 = vmatprep.subr.mxu0 0.0
    %61 = vmatpush1.msra.mxu0 0.0
    %62 = vmatprep.subr.mxu0 0.0
    %63 = vmatpush1.msra.mxu0 0.0
    %64 = vmatprep.subr.mxu0 0.0
    %65 = vmatpush1.msra.mxu0 0.0
    %66 = vmatprep.subr.mxu0 0.0
    %67 = vmatpush1.msra.mxu0 0.0
    %68 = vmatprep.subr.mxu0 0.0
    %69 = vmatpush1.msra.mxu0 0.0
    %70 = vmatprep.subr.mxu0 0.0
    %71 = vmatpush1.msra.mxu0 0.0
    %72 = vmatprep.subr.mxu0 0.0
    %73 = vmatpush1.msra.mxu0 0.0
    %74 = vmatprep.subr.mxu0 0.0
    %75 = vmatpush1.msra.mxu0 0.0
    %76 = vmatprep.subr.mxu0 0.0
    %77 = vmatpush1.msra.mxu0 0.0
    %78 = vmatprep.subr.mxu0 0.0
    %79 = vmatpush1.msra.mxu0 0.0
    %80 = vmatprep.subr.mxu0 0.0
    %81 = vmatpush1.msra.mxu0 0.0
    %82 = vmatprep.subr.mxu0 0.0
    %83 = vmatpush1.msra.mxu0 0.0
    %84 = vmatprep.subr.mxu0 0.0
    %85 = vmatpush1.msra.mxu0 0.0
    %86 = vmatprep.subr.mxu0 0.0
    %87 = vmatpush1.msra.mxu0 0.0
    %88 = vmatprep.subr.mxu0 0.0
    %89 = vmatpush1.msra.mxu0 0.0
    %90 = vmatprep.subr.mxu0 0.0
    %91 = vmatpush1.msra.mxu0 0.0
    %92 = vmatprep.subr.mxu0 0.0
    %93 = vmatpush1.msra.mxu0 0.0
    %94 = vmatprep.subr.mxu0 0.0
    %95 = vmatpush1.msra.mxu0 0.0
    %96 = vmatprep.subr.mxu0 0.0
    %97 = vmatpush1.msra.mxu0 0.0
    %98 = vmatprep.subr.mxu0 0.0
    %99 = vmatpush1.msra.mxu0 0.0
    %100 = vmatprep.subr.mxu0 0.0
    %101 = vmatpush1.msra.mxu0 0.0
    %102 = vmatprep.subr.mxu0 0.0
    %103 = vmatpush1.msra.mxu0 0.0
    %104 = vmatprep.subr.mxu0 0.0
    %105 = vmatpush1.msra.mxu0 0.0
    %106 = vmatprep.subr.mxu0 0.0
    %107 = vmatpush1.msra.mxu0 0.0
    %108 = vmatprep.subr.mxu0 0.0
    %109 = vmatpush1.msra.mxu0 0.0
    %110 = vmatprep.subr.mxu0 0.0
    %111 = vmatpush1.msra.mxu0 0.0
    %112 = vmatprep.mubr.f32.mxu0 0.0
    %113 = vmatmul.mubr.f32.gmra.mrb[0].mxu0 %v46
    %v114 = vpop.f32.mrb[0].mxu0
    %v115 = vadd.f32 0.0, %v114
    %v116 = vpop.f32.mrb[0].mxu0
    %117 = vdwg.mxu0
    %v118 = vsel %vm44, %v115, 0.0
    %v119 = vrot.slane %v118, 4
    %v120 = vadd.f32 %v118, %v119
    %v121 = vrot.slane %v120, 2
    %v122 = vadd.f32 %v120, %v121
    %v123 = vrot.slane %v122, 1
    %v124 = vadd.f32 %v122, %v123
    %v125 = vmul.f32 %v115, %v115
    %v126 = vsel %vm44, %v125, 0.0
    %v127 = vrot.slane %v126, 4
    %v128 = vadd.f32 %v126, %v127
    %v129 = vrot.slane %v128, 2
    %v130 = vadd.f32 %v128, %v129
    %v131 = vrot.slane %v130, 1
    %v132 = vadd.f32 %v130, %v131
    %v133 = vmul.f32 %v124, 0.125
    %v134 = vmul.f32 %v132, 0.125
    %v135 = vmul.f32 %v133, %v133
    %v136 = vsub.f32 %v134, %v135
    %v137 = vmax.f32 %v136, 0.0
    %v138 = vld [vmem:[%s2] sm:$0x1]
    %v139 = vadd.f32 %v137, 1e-05
    %v140 = vrsqrt.pop %v139
    %v141 = vmul.f32 %v138, %v140
    %v142 = vld [vmem:[%s3] sm:$0x1]
    %v143 = vmul.f32 %v133, %v141
    %v144 = vsub.f32 %v142, %v143
    %v145 = vlaneseq
    %v146 = vshrl.u32 %v145, 7
    %v147 = vsub.s32 0, %v146
    %v148 = vrot.slane %v141, %v147
    %v149 = vmul.f32 %v115, %v148
    %v150 = vlaneseq
    %v151 = vshrl.u32 %v150, 7
    %v152 = vsub.s32 0, %v151
    %v153 = vrot.slane %v144, %v152
    %v154 = vadd.f32 %v149, %v153
    %v155 = vmax.f32 %v154, 0.0
    %s156 = scalar_lea.vmem [#allocation2], 40
    %v157 = vld [vmem:[%s156] sm:$0xff]
    %v158 = vld [vmem:[%s156 + $0x8] sm:$0xff]
    %v159 = vld [vmem:[%s156 + $0x10] sm:$0xff]
    %v160 = vld [vmem:[%s156 + $0x18] sm:$0xff]
    %v161 = vld [vmem:[%s156 + $0x20] sm:$0xff]
    %v163 = vsel %vm44, %v155, 0
    %165 = vmatprep.subr.mxu0 0.0
    %166 = vmatpush1.msra.mxu0 %v157
    %167 = vmatprep.subr.mxu0 0.0
    %168 = vmatpush1.msra.mxu0 %v158
    %169 = vmatprep.subr.mxu0 0.0
    %170 = vmatpush1.msra.mxu0 %v159
    %171 = vmatprep.subr.mxu0 0.0
    %172 = vmatpush1.msra.mxu0 %v160
    %173 = vmatprep.subr.mxu0 0.0
    %174 = vmatpush1.msra.mxu0 %v161
    %175 = vmatprep.subr.mxu0 0.0
    %176 = vmatpush1.msra.mxu0 0.0
    %177 = vmatprep.subr.mxu0 0.0
    %178 = vmatpush1.msra.mxu0 0.0
    %179 = vmatprep.subr.mxu0 0.0
    %180 = vmatpush1.msra.mxu0 0.0
    %181 = vmatprep.subr.mxu0 0.0
    %182 = vmatpush1.msra.mxu0 0.0
    %183 = vmatprep.subr.mxu0 0.0
    %184 = vmatpush1.msra.mxu0 0.0
    %185 = vmatprep.subr.mxu0 0.0
    %186 = vmatpush1.msra.mxu0 0.0
    %187 = vmatprep.subr.mxu0 0.0
    %188 = vmatpush1.msra.mxu0 0.0
    %189 = vmatprep.subr.mxu0 0.0
    %190 = vmatpush1.msra.mxu0 0.0
    %191 = vmatprep.subr.mxu0 0.0
    %192 = vmatpush1.msra.mxu0 0.0
    %193 = vmatprep.subr.mxu0 0.0
    %194 = vmatpush1.msra.mxu0 0.0
    %195 = vmatprep.subr.mxu0 0.0
    %196 = vmatpush1.msra.mxu0 0.0
    %197 = vmatprep.subr.mxu0 0.0
    %198 = vmatpush1.msra.mxu0 0.0
    %199 = vmatprep.subr.mxu0 0.0
    %200 = vmatpush1.msra.mxu0 0.0
    %201 = vmatprep.subr.mxu0 0.0
    %202 = vmatpush1.msra.mxu0 0.0
    %203 = vmatprep.subr.mxu0 0.0
    %204 = vmatpush1.msra.mxu0 0.0
    %205 = vmatprep.subr.mxu0 0.0
    %206 = vmatpush1.msra.mxu0 0.0
    %207 = vmatprep.subr.mxu0 0.0
    %208 = vmatpush1.msra.mxu0 0.0
    %209 = vmatprep.subr.mxu0 0.0
    %210 = vmatpush1.msra.mxu0 0.0
    %211 = vmatprep.subr.mxu0 0.0
    %212 = vmatpush1.msra.mxu0 0.0
    %213 = vmatprep.subr.mxu0 0.0
    %214 = vmatpush1.msra.mxu0 0.0
    %215 = vmatprep.subr.mxu0 0.0
    %216 = vmatpush1.msra.mxu0 0.0
    %217 = vmatprep.subr.mxu0 0.0
    %218 = vmatpush1.msra.mxu0 0.0
    %219 = vmatprep.subr.mxu0 0.0
    %220 = vmatpush1.msra.mxu0 0.0
    %221 = vmatprep.subr.mxu0 0.0
    %222 = vmatpush1.msra.mxu0 0.0
    %223 = vmatprep.subr.mxu0 0.0
    %224 = vmatpush1.msra.mxu0 0.0
    %225 = vmatprep.subr.mxu0 0.0
    %226 = vmatpush1.msra.mxu0 0.0
    %227 = vmatprep.subr.mxu0 0.0
    %228 = vmatpush1.msra.mxu0 0.0
    %229 = vmatprep.mubr.f32.mxu0 0.0
    %230 = vmatmul.mubr.f32.gmra.mrb[0].mxu0 %v163
    %v231 = vpop.f32.mrb[0].mxu0
    %v232 = vadd.f32 0.0, %v231
    %v233 = vpop.f32.mrb[0].mxu0
    %234 = vdwg.mxu0
    %v235 = vsel %vm44, %v232, 0.0
    %v236 = vrot.slane %v235, 4
    %v237 = vadd.f32 %v235, %v236
    %v238 = vrot.slane %v237, 2
    %v239 = vadd.f32 %v237, %v238
    %v240 = vrot.slane %v239, 1
    %v241 = vadd.f32 %v239, %v240
    %v242 = vmul.f32 %v232, %v232
    %v243 = vsel %vm44, %v242, 0.0
    %v244 = vrot.slane %v243, 4
    %v245 = vadd.f32 %v243, %v244
    %v246 = vrot.slane %v245, 2
    %v247 = vadd.f32 %v245, %v246
    %v248 = vrot.slane %v247, 1
    %v249 = vadd.f32 %v247, %v248
    %v250 = vmul.f32 %v241, 0.125
    %v251 = vmul.f32 %v249, 0.125
    %v252 = vmul.f32 %v250, %v250
    %v253 = vsub.f32 %v251, %v252
    %v254 = vmax.f32 %v253, 0.0
    %v255 = vld [vmem:[%s2 + $0x1] sm:$0x1]
    %v256 = vadd.f32 %v254, 1e-05
    %v257 = vrsqrt.pop %v256
    %v258 = vmul.f32 %v255, %v257
    %v259 = vld [vmem:[%s3 + $0x1] sm:$0x1]
    %v260 = vmul.f32 %v250, %v258
    %v261 = vsub.f32 %v259, %v260
    %v262 = vlaneseq
    %v263 = vshrl.u32 %v262, 7
    %v264 = vsub.s32 0, %v263
    %v265 = vrot.slane %v258, %v264
    %v266 = vmul.f32 %v232, %v265
    %v267 = vlaneseq
    %v268 = vshrl.u32 %v267, 7
    %v269 = vsub.s32 0, %v268
    %v270 = vrot.slane %v261, %v269
    %v271 = vadd.f32 %v266, %v270
    %v272 = vmax.f32 %v271, 0.0
    %s273 = scalar_lea.vmem [#allocation2], 80
    %v274 = vld [vmem:[%s273] sm:$0xff]
    %v275 = vld [vmem:[%s273 + $0x8] sm:$0xff]
    %v276 = vld [vmem:[%s273 + $0x10] sm:$0xff]
    %v277 = vld [vmem:[%s273 + $0x18] sm:$0xff]
    %v278 = vld [vmem:[%s273 + $0x20] sm:$0xff]
    %v280 = vsel %vm44, %v272, 0
    %282 = vmatprep.subr.mxu0 0.0
    %283 = vmatpush1.msra.mxu0 %v274
    %284 = vmatprep.subr.mxu0 0.0
    %285 = vmatpush1.msra.mxu0 %v275
    %286 = vmatprep.subr.mxu0 0.0
    %287 = vmatpush1.msra.mxu0 %v276
    %288 = vmatprep.subr.mxu0 0.0
    %289 = vmatpush1.msra.mxu0 %v277
    %290 = vmatprep.subr.mxu0 0.0
    %291 = vmatpush1.msra.mxu0 %v278
    %292 = vmatprep.subr.mxu0 0.0
    %293 = vmatpush1.msra.mxu0 0.0
    %294 = vmatprep.subr.mxu0 0.0
    %295 = vmatpush1.msra.mxu0 0.0
    %296 = vmatprep.subr.mxu0 0.0
    %297 = vmatpush1.msra.mxu0 0.0
    %298 = vmatprep.subr.mxu0 0.0
    %299 = vmatpush1.msra.mxu0 0.0
    %300 = vmatprep.subr.mxu0 0.0
    %301 = vmatpush1.msra.mxu0 0.0
    %302 = vmatprep.subr.mxu0 0.0
    %303 = vmatpush1.msra.mxu0 0.0
    %304 = vmatprep.subr.mxu0 0.0
    %305 = vmatpush1.msra.mxu0 0.0
    %306 = vmatprep.subr.mxu0 0.0
    %307 = vmatpush1.msra.mxu0 0.0
    %308 = vmatprep.subr.mxu0 0.0
    %309 = vmatpush1.msra.mxu0 0.0
    %310 = vmatprep.subr.mxu0 0.0
    %311 = vmatpush1.msra.mxu0 0.0
    %312 = vmatprep.subr.mxu0 0.0
    %313 = vmatpush1.msra.mxu0 0.0
    %314 = vmatprep.subr.mxu0 0.0
    %315 = vmatpush1.msra.mxu0 0.0
    %316 = vmatprep.subr.mxu0 0.0
    %317 = vmatpush1.msra.mxu0 0.0
    %318 = vmatprep.subr.mxu0 0.0
    %319 = vmatpush1.msra.mxu0 0.0
    %320 = vmatprep.subr.mxu0 0.0
    %321 = vmatpush1.msra.mxu0 0.0
    %322 = vmatprep.subr.mxu0 0.0
    %323 = vmatpush1.msra.mxu0 0.0
    %324 = vmatprep.subr.mxu0 0.0
    %325 = vmatpush1.msra.mxu0 0.0
    %326 = vmatprep.subr.mxu0 0.0
    %327 = vmatpush1.msra.mxu0 0.0
    %328 = vmatprep.subr.mxu0 0.0
    %329 = vmatpush1.msra.mxu0 0.0
    %330 = vmatprep.subr.mxu0 0.0
    %331 = vmatpush1.msra.mxu0 0.0
    %332 = vmatprep.subr.mxu0 0.0
    %333 = vmatpush1.msra.mxu0 0.0
    %334 = vmatprep.subr.mxu0 0.0
    %335 = vmatpush1.msra.mxu0 0.0
    %336 = vmatprep.subr.mxu0 0.0
    %337 = vmatpush1.msra.mxu0 0.0
    %338 = vmatprep.subr.mxu0 0.0
    %339 = vmatpush1.msra.mxu0 0.0
    %340 = vmatprep.subr.mxu0 0.0
    %341 = vmatpush1.msra.mxu0 0.0
    %342 = vmatprep.subr.mxu0 0.0
    %343 = vmatpush1.msra.mxu0 0.0
    %344 = vmatprep.subr.mxu0 0.0
    %345 = vmatpush1.msra.mxu0 0.0
    %346 = vmatprep.mubr.f32.mxu0 0.0
    %347 = vmatmul.mubr.f32.gmra.mrb[0].mxu0 %v280
    %v348 = vpop.f32.mrb[0].mxu0
    %v349 = vadd.f32 0.0, %v348
    %v350 = vpop.f32.mrb[0].mxu0
    %351 = vdwg.mxu0
    %v352 = vsel %vm44, %v349, 0.0
    %v353 = vrot.slane %v352, 4
    %v354 = vadd.f32 %v352, %v353
    %v355 = vrot.slane %v354, 2
    %v356 = vadd.f32 %v354, %v355
    %v357 = vrot.slane %v356, 1
    %v358 = vadd.f32 %v356, %v357
    %v359 = vmul.f32 %v349, %v349
    %v360 = vsel %vm44, %v359, 0.0
    %v361 = vrot.slane %v360, 4
    %v362 = vadd.f32 %v360, %v361
    %v363 = vrot.slane %v362, 2
    %v364 = vadd.f32 %v362, %v363
    %v365 = vrot.slane %v364, 1
    %v366 = vadd.f32 %v364, %v365
    %v367 = vmul.f32 %v358, 0.125
    %v368 = vmul.f32 %v366, 0.125
    %v369 = vmul.f32 %v367, %v367
    %v370 = vsub.f32 %v368, %v369
    %v371 = vmax.f32 %v370, 0.0
    %v372 = vld [vmem:[%s2 + $0x2] sm:$0x1]
    %v373 = vadd.f32 %v371, 1e-05
    %v374 = vrsqrt.pop %v373
    %v375 = vmul.f32 %v372, %v374
    %v376 = vld [vmem:[%s3 + $0x2] sm:$0x1]
    %v377 = vmul.f32 %v367, %v375
    %v378 = vsub.f32 %v376, %v377
    %v379 = vlaneseq
    %v380 = vshrl.u32 %v379, 7
    %v381 = vsub.s32 0, %v380
    %v382 = vrot.slane %v375, %v381
    %v383 = vmul.f32 %v349, %v382
    %v384 = vlaneseq
    %v385 = vshrl.u32 %v384, 7
    %v386 = vsub.s32 0, %v385
    %v387 = vrot.slane %v378, %v386
    %v388 = vadd.f32 %v383, %v387
    %v389 = vmax.f32 %v388, 0.0
    %s390 = scalar_lea.vmem [#allocation2], 120
    %v391 = vld [vmem:[%s390] sm:$0xff]
    %v392 = vld [vmem:[%s390 + $0x8] sm:$0xff]
    %v393 = vld [vmem:[%s390 + $0x10] sm:$0xff]
    %v394 = vld [vmem:[%s390 + $0x18] sm:$0xff]
    %v395 = vld [vmem:[%s390 + $0x20] sm:$0xff]
    %v397 = vsel %vm44, %v389, 0
    %399 = vmatprep.subr.mxu0 0.0
    %400 = vmatpush1.msra.mxu0 %v391
    %401 = vmatprep.subr.mxu0 0.0
    %402 = vmatpush1.msra.mxu0 %v392
    %403 = vmatprep.subr.mxu0 0.0
    %404 = vmatpush1.msra.mxu0 %v393
    %405 = vmatprep.subr.mxu0 0.0
    %406 = vmatpush1.msra.mxu0 %v394
    %407 = vmatprep.subr.mxu0 0.0
    %408 = vmatpush1.msra.mxu0 %v395
    %409 = vmatprep.subr.mxu0 0.0
    %410 = vmatpush1.msra.mxu0 0.0
    %411 = vmatprep.subr.mxu0 0.0
    %412 = vmatpush1.msra.mxu0 0.0
    %413 = vmatprep.subr.mxu0 0.0
    %414 = vmatpush1.msra.mxu0 0.0
    %415 = vmatprep.subr.mxu0 0.0
    %416 = vmatpush1.msra.mxu0 0.0
    %417 = vmatprep.subr.mxu0 0.0
    %418 = vmatpush1.msra.mxu0 0.0
    %419 = vmatprep.subr.mxu0 0.0
    %420 = vmatpush1.msra.mxu0 0.0
    %421 = vmatprep.subr.mxu0 0.0
    %422 = vmatpush1.msra.mxu0 0.0
    %423 = vmatprep.subr.mxu0 0.0
    %424 = vmatpush1.msra.mxu0 0.0
    %425 = vmatprep.subr.mxu0 0.0
    %426 = vmatpush1.msra.mxu0 0.0
    %427 = vmatprep.subr.mxu0 0.0
    %428 = vmatpush1.msra.mxu0 0.0
    %429 = vmatprep.subr.mxu0 0.0
    %430 = vmatpush1.msra.mxu0 0.0
    %431 = vmatprep.subr.mxu0 0.0
    %432 = vmatpush1.msra.mxu0 0.0
    %433 = vmatprep.subr.mxu0 0.0
    %434 = vmatpush1.msra.mxu0 0.0
    %435 = vmatprep.subr.mxu0 0.0
    %436 = vmatpush1.msra.mxu0 0.0
    %437 = vmatprep.subr.mxu0 0.0
    %438 = vmatpush1.msra.mxu0 0.0
    %439 = vmatprep.subr.mxu0 0.0
    %440 = vmatpush1.msra.mxu0 0.0
    %441 = vmatprep.subr.mxu0 0.0
    %442 = vmatpush1.msra.mxu0 0.0
    %443 = vmatprep.subr.mxu0 0.0
    %444 = vmatpush1.msra.mxu0 0.0
    %445 = vmatprep.subr.mxu0 0.0
    %446 = vmatpush1.msra.mxu0 0.0
    %447 = vmatprep.subr.mxu0 0.0
    %448 = vmatpush1.msra.mxu0 0.0
    %449 = vmatprep.subr.mxu0 0.0
    %450 = vmatpush1.msra.mxu0 0.0
    %451 = vmatprep.subr.mxu0 0.0
    %452 = vmatpush1.msra.mxu0 0.0
    %453 = vmatprep.subr.mxu0 0.0
    %454 = vmatpush1.msra.mxu0 0.0
    %455 = vmatprep.subr.mxu0 0.0
    %456 = vmatpush1.msra.mxu0 0.0
    %457 = vmatprep.subr.mxu0 0.0
    %458 = vmatpush1.msra.mxu0 0.0
    %459 = vmatprep.subr.mxu0 0.0
    %460 = vmatpush1.msra.mxu0 0.0
    %461 = vmatprep.subr.mxu0 0.0
    %462 = vmatpush1.msra.mxu0 0.0
    %463 = vmatprep.mubr.f32.mxu0 0.0
    %464 = vmatmul.mubr.f32.gmra.mrb[0].mxu0 %v397
    %v465 = vpop.f32.mrb[0].mxu0
    %v466 = vadd.f32 0.0, %v465
    %v467 = vpop.f32.mrb[0].mxu0
    %468 = vdwg.mxu0
    %v469 = vsel %vm44, %v466, 0.0
    %v470 = vrot.slane %v469, 4
    %v471 = vadd.f32 %v469, %v470
    %v472 = vrot.slane %v471, 2
    %v473 = vadd.f32 %v471, %v472
    %v474 = vrot.slane %v473, 1
    %v475 = vadd.f32 %v473, %v474
    %v476 = vmul.f32 %v466, %v466
    %v477 = vsel %vm44, %v476, 0.0
    %v478 = vrot.slane %v477, 4
    %v479 = vadd.f32 %v477, %v478
    %v480 = vrot.slane %v479, 2
    %v481 = vadd.f32 %v479, %v480
    %v482 = vrot.slane %v481, 1
    %v483 = vadd.f32 %v481, %v482
    %v484 = vmul.f32 %v475, 0.125
    %v485 = vmul.f32 %v483, 0.125
    %v486 = vmul.f32 %v484, %v484
    %v487 = vsub.f32 %v485, %v486
    %v488 = vmax.f32 %v487, 0.0
    %v489 = vld [vmem:[%s2 + $0x3] sm:$0x1]
    %v490 = vadd.f32 %v488, 1e-05
    %v491 = vrsqrt.pop %v490
    %v492 = vmul.f32 %v489, %v491
    %v493 = vld [vmem:[%s3 + $0x3] sm:$0x1]
    %v494 = vmul.f32 %v484, %v492
    %v495 = vsub.f32 %v493, %v494
    %v496 = vlaneseq
    %v497 = vshrl.u32 %v496, 7
    %v498 = vsub.s32 0, %v497
    %v499 = vrot.slane %v492, %v498
    %v500 = vmul.f32 %v466, %v499
    %v501 = vlaneseq
    %v502 = vshrl.u32 %v501, 7
    %v503 = vsub.s32 0, %v502
    %v504 = vrot.slane %v495, %v503
    %v505 = vadd.f32 %v500, %v504
    %v506 = vmax.f32 %v505, 0.0
    %v507 = vld [vmem:[%s4] sm:$0xff]
    %v508 = vld [vmem:[%s4 + $0x8] sm:$0xff]
    %v509 = vld [vmem:[%s4 + $0x10] sm:$0xff]
    %v510 = vld [vmem:[%s4 + $0x18] sm:$0xff]
    %v511 = vld [vmem:[%s4 + $0x20] sm:$0xff]
    %v512 = vld [vmem:[%s5] sm:$0x1]
    %v514 = vlaneseq
    %v515 = vshrl.u32 %v514, 7
    %v516 = vsub.s32 0, %v515
    %v517 = vrot.slane %v512, %v516
    %v520 = vsel %vm44, %v506, 0
    %522 = vmatprep.subr.mxu0 0.0
    %523 = vmatpush1.msra.mxu0 %v507
    %524 = vmatprep.subr.mxu0 0.0
    %525 = vmatpush1.msra.mxu0 %v508
    %526 = vmatprep.subr.mxu0 0.0
    %527 = vmatpush1.msra.mxu0 %v509
    %528 = vmatprep.subr.mxu0 0.0
    %529 = vmatpush1.msra.mxu0 %v510
    %530 = vmatprep.subr.mxu0 0.0
    %531 = vmatpush1.msra.mxu0 %v511
    %532 = vmatprep.subr.mxu0 0.0
    %533 = vmatpush1.msra.mxu0 0.0
    %534 = vmatprep.subr.mxu0 0.0
    %535 = vmatpush1.msra.mxu0 0.0
    %536 = vmatprep.subr.mxu0 0.0
    %537 = vmatpush1.msra.mxu0 0.0
    %538 = vmatprep.subr.mxu0 0.0
    %539 = vmatpush1.msra.mxu0 0.0
    %540 = vmatprep.subr.mxu0 0.0
    %541 = vmatpush1.msra.mxu0 0.0
    %542 = vmatprep.subr.mxu0 0.0
    %543 = vmatpush1.msra.mxu0 0.0
    %544 = vmatprep.subr.mxu0 0.0
    %545 = vmatpush1.msra.mxu0 0.0
    %546 = vmatprep.subr.mxu0 0.0
    %547 = vmatpush1.msra.mxu0 0.0
    %548 = vmatprep.subr.mxu0 0.0
    %549 = vmatpush1.msra.mxu0 0.0
    %550 = vmatprep.subr.mxu0 0.0
    %551 = vmatpush1.msra.mxu0 0.0
    %552 = vmatprep.subr.mxu0 0.0
    %553 = vmatpush1.msra.mxu0 0.0
    %554 = vmatprep.subr.mxu0 0.0
    %555 = vmatpush1.msra.mxu0 0.0
    %556 = vmatprep.subr.mxu0 0.0
    %557 = vmatpush1.msra.mxu0 0.0
    %558 = vmatprep.subr.mxu0 0.0
    %559 = vmatpush1.msra.mxu0 0.0
    %560 = vmatprep.subr.mxu0 0.0
    %561 = vmatpush1.msra.mxu0 0.0
    %562 = vmatprep.subr.mxu0 0.0
    %563 = vmatpush1.msra.mxu0 0.0
    %564 = vmatprep.subr.mxu0 0.0
    %565 = vmatpush1.msra.mxu0 0.0
    %566 = vmatprep.subr.mxu0 0.0
    %567 = vmatpush1.msra.mxu0 0.0
    %568 = vmatprep.subr.mxu0 0.0
    %569 = vmatpush1.msra.mxu0 0.0
    %570 = vmatprep.subr.mxu0 0.0
    %571 = vmatpush1.msra.mxu0 0.0
    %572 = vmatprep.subr.mxu0 0.0
    %573 = vmatpush1.msra.mxu0 0.0
    %574 = vmatprep.subr.mxu0 0.0
    %575 = vmatpush1.msra.mxu0 0.0
    %576 = vmatprep.subr.mxu0 0.0
    %577 = vmatpush1.msra.mxu0 0.0
    %578 = vmatprep.subr.mxu0 0.0
    %579 = vmatpush1.msra.mxu0 0.0
    %580 = vmatprep.subr.mxu0 0.0
    %581 = vmatpush1.msra.mxu0 0.0
    %582 = vmatprep.subr.mxu0 0.0
    %583 = vmatpush1.msra.mxu0 0.0
    %584 = vmatprep.subr.mxu0 0.0
    %585 = vmatpush1.msra.mxu0 0.0
    %586 = vmatprep.mubr.f32.mxu0 0.0
    %587 = vmatmul.mubr.f32.gmra.mrb[0].mxu0 %v520
    %v588 = vpop.f32.mrb[0].mxu0
    %v589 = vadd.f32 %v517, %v588
    %v590 = vpop.f32.mrb[0].mxu0
    %591 = vdwg.mxu0
    %vm592 = vcmask 80896
    %593 = vst.msk [vmem:[#allocation5] sm:$0xff] %vm592, %v589
    // Predicated region
    $region30: #{tpu_custom_call.1} parent=1 // pred_check
      _
    $region31: #{tpu_custom_call.1} parent=1 // pred_check_branch
      %595 = sbr.rel (0) target = $region33
    $region32: #{tpu_custom_call.1} parent=1 // pred_region
      %s597 = ssub.s32 128, 128
      %598 = vsyncadd [#allocation4], %s597
      %s600 = sshll.u32 [#allocation5], 4
      %s601 = int_to_ptr.vmem [resolvable:$true] %s600
      %603 = dma.vmem_to_hbm [thread:$0]  %s601, 128, %s6, [#allocation4]
    $region33: #{tpu_custom_call.1} parent=1 // pred_fallthru
      _
    // Predicated region
    $region34: #{tpu_custom_call.1} parent=1 // pred_check
      _
    $region35: #{tpu_custom_call.1} parent=1 // pred_check_branch
      %605 = sbr.rel (0) target = $region37
    $region36: #{tpu_custom_call.1} parent=1 // pred_region
      %606 = dma.done [#allocation4], 128
    $region37: #{tpu_custom_call.1} parent=1 // pred_fallthru
      _
    %607 = vsyncpa [#allocation3], 1
    %608 = vsyncpa [#allocation4], 1

</llo_original>
